<compile_context>
chip_gen: v6e
topology: v6e:2x2x1
jax: 0.10.0
libtpu: 0.0.40
codegen_flags: <defaults>
</compile_context>

<pallas_src>
import functools

import jax
import jax.numpy as jnp
from jax.experimental import pallas as pl
from jax.experimental.pallas import tpu as pltpu


_TILE = 256  # rank / gather tile along the point axis (multiple of 128)


def _round_up(x, m):
    return (x + m - 1) // m * m


def _sampling_kernel(pts_ref, key_ref, u_ref, out_ref, key_sc,
                     *, n_pad, tile, n_points):
    """One batch element per grid step.

    pts_ref : (1, C, N_pad) f32  points, transposed (lane-dense point axis)
    key_ref : (1, 1, N_pad) i32  random permutation values in [0, N_pad)
    u_ref   : (1, 1, P)     f32  uniforms for the with-replacement branch
    out_ref : (1, C, P)          sampled points, transposed (lane-dense)
    key_sc  : (1, N_pad)    i32  VMEM scratch: effective sort keys
    """
    c = pts_ref.shape[1]
    p = n_points

    # ---- mask of points whose coordinate sum != 0 (the wrapper's zero
    # padding rows are filtered automatically, same as GRNet's padding) ----
    pts_all = pts_ref[0]                                     # (C, N_pad)
    s_row = jnp.sum(pts_all, axis=0, keepdims=True)          # (1, N_pad)
    nz_row = s_row != 0.0
    n_pts = jnp.sum(nz_row.astype(jnp.int32))                # scalar

    # ---- effective sort key: distinct int32 per point; zero points get a
    # +N_pad offset so they rank strictly after every nonzero point (strict
    # permutation, single integer compare in the inner loop). ----
    key_sc[...] = key_ref[0] + jnp.where(nz_row, 0, n_pad).astype(jnp.int32)

    # ---- target rank for each of the P output slots ----
    kidx = jax.lax.broadcasted_iota(jnp.int32, (1, p), 1)
    u_row = u_ref[0]                                         # (1, P)
    r_repl = jnp.floor(u_row * n_pts.astype(jnp.float32)).astype(jnp.int32)
    r_repl = jnp.minimum(jnp.maximum(r_repl, 0), jnp.maximum(n_pts - 1, 0))
    # NOTE: if n_pts == 0 every slot collapses to rank 0 and the output row is
    # an all-zero point (torch would raise instead).
    r_row = jnp.where(n_pts >= p, kidx, r_repl)              # (1, P) i32

    num_t = n_pad // tile

    def j_body(jt, acc):
        j0 = pl.multiple_of(jt * tile, tile)
        key_j_row = key_sc[:, pl.ds(j0, tile)]               # (1, tile)
        # column view of this tile's keys via a canonical (tile, tile)
        # sublane-broadcast + XLU transpose (free slot next to the VPU work)
        key_j_col = jnp.transpose(
            jnp.broadcast_to(key_j_row, (tile, tile)), (1, 0))[:, 0:1]

        def i_body(it, rank_col):
            i0 = pl.multiple_of(it * tile, tile)
            key_i_row = key_sc[:, pl.ds(i0, tile)]           # (1, tile)
            lt = (key_i_row < key_j_col).astype(jnp.int32)   # (tile, tile)
            return rank_col + jnp.sum(lt, axis=1, keepdims=True)

        # rank_col[j] = #{i : key_i < key_j}  (rank within the random order;
        # nonzero points occupy ranks 0 .. n_pts-1)
        rank_col = jax.lax.fori_loop(0, num_t, i_body,
                                     jnp.zeros((tile, 1), jnp.int32))

        # blocked one-hot gather: out[:, k] += pts[:, j] where rank_j == r_k
        onehot = (rank_col == r_row).astype(jnp.float32)     # (tile, P)
        pts_blk = pts_ref[0, :, pl.ds(j0, tile)]             # (C, tile)
        return acc + jnp.dot(pts_blk, onehot,
                             preferred_element_type=jnp.float32)

    out_t = jax.lax.fori_loop(0, num_t, j_body,
                              jnp.zeros((c, p), jnp.float32))
    out_ref[0] = out_t.astype(out_ref.dtype)


@functools.partial(jax.jit, static_argnames=("n_points",))
def _random_point_sampling_impl(cloud, rng_key, n_points):
    B, N, C = cloud.shape
    n_pad = _round_up(max(N, _TILE), _TILE)

    # Zero-pad the point axis: padded rows have coordinate-sum 0 and are
    # filtered by the kernel exactly like GRNet's zero padding.
    pts = cloud.astype(jnp.float32)
    if n_pad != N:
        pts = jnp.pad(pts, ((0, 0), (0, n_pad - N), (0, 0)))
    pts_t = jnp.transpose(pts, (0, 2, 1))                    # (B, C, N_pad)

    k_perm, k_repl = jax.random.split(rng_key)
    # Random priorities == a random permutation of [0, N_pad): distinct int32
    # keys, so sorting by them is a uniformly random permutation and the
    # kernel needs no tie-break arithmetic.
    base = jnp.broadcast_to(jnp.arange(n_pad, dtype=jnp.int32), (B, n_pad))
    key_base = jax.random.permutation(k_perm, base, axis=1, independent=True)
    key_base = key_base.astype(jnp.int32)[:, None, :]        # (B, 1, N_pad)
    u = jax.random.uniform(k_repl, (B, n_points),
                           dtype=jnp.float32)[:, None, :]    # (B, 1, P)

    kernel = functools.partial(_sampling_kernel, n_pad=n_pad, tile=_TILE,
                               n_points=n_points)

    flops = B * (2 * n_pad * n_pad + 2 * C * n_pad * n_points)
    bytes_accessed = 4 * B * (C * n_pad + n_pad + n_points + C * n_points)

    out_t = pl.pallas_call(
        kernel,
        out_shape=jax.ShapeDtypeStruct((B, C, n_points), cloud.dtype),
        # Batch is a parallel grid axis (both v7x TensorCores get work when
        # B >= 2); the point-axis reduction is an in-kernel blocked loop.
        grid=(B,),
        in_specs=[
            pl.BlockSpec((1, C, n_pad), lambda b: (b, 0, 0)),
            pl.BlockSpec((1, 1, n_pad), lambda b: (b, 0, 0)),
            pl.BlockSpec((1, 1, n_points), lambda b: (b, 0, 0)),
        ],
        out_specs=pl.BlockSpec((1, C, n_points), lambda b: (b, 0, 0)),
        scratch_shapes=[pltpu.VMEM((1, n_pad), jnp.int32)],
        # Per-batch VMEM: ~16*N_pad bytes of blocks (double-buffered) plus
        # <1 MiB of (TILE,TILE)/(TILE,P) tile temporaries -- well inside the
        # 32 MiB scoped default on v5e/v6e and v7x's 64 MiB physical VMEM.
        compiler_params=pltpu.CompilerParams(
            dimension_semantics=("parallel",)),
        cost_estimate=pl.CostEstimate(flops=flops, transcendentals=0,
                                      bytes_accessed=bytes_accessed),
    )(pts_t, key_base, u)

    # lane-dense (B, C, P) from the kernel -> module layout (B, P, C)
    return jnp.transpose(out_t, (0, 2, 1))


def random_point_sampling(pred_cloud, rng_key, n_points, partial_cloud=None):
    """JAX/Pallas equivalent of GRNet RandomPointSampling.forward."""
    if partial_cloud is not None:
        cloud = jnp.concatenate([partial_cloud, pred_cloud], axis=1)
    else:
        cloud = pred_cloud
    return _random_point_sampling_impl(cloud, rng_key, n_points)


if __name__ == "__main__":
    key = jax.random.PRNGKey(0)
    k_pred, k_part, k_sample = jax.random.split(key, 3)

    B, N_pred, N_part = 2, 24, 8
    pred_cloud = jax.random.normal(k_pred, (B, N_pred, 3), dtype=jnp.float32)
    partial_cloud = jax.random.normal(k_part, (B, N_part, 3), dtype=jnp.float32)
    # Zero out a few points to exercise the non-zero filtering path
    # (GRNet feeds padded clouds whose padding rows are all zeros).
    partial_cloud = partial_cloud.at[:, -3:, :].set(0.0)
    cloud = jnp.concatenate([partial_cloud, pred_cloud], axis=1)  # (B, 32, 3)

    # --- branch 1: enough non-zero points -> sample WITHOUT replacement ---
    n_points = 16
    out = random_point_sampling(pred_cloud, k_sample, n_points,
                                partial_cloud=partial_cloud)
    jax.block_until_ready(out)
    assert out.shape == (B, n_points, 3), out.shape
    assert out.dtype == pred_cloud.dtype
    # Every sampled point must be a non-padding (non-zero) point.
    assert bool(jnp.all(jnp.any(out != 0.0, axis=-1)))
    # Every sampled point must be an (exact-ish) copy of an input point.
    d = jnp.abs(out[:, :, None, :] - cloud[:, None, :, :]).max(-1)  # (B, P, N)
    assert bool(jnp.all(d.min(-1) < 1e-5))
    # Without replacement -> the P sampled points are distinct input points.
    src = jax.device_get(jnp.argmin(d, axis=-1))                    # (B, P)
    for b in range(B):
        assert len(set(int(i) for i in src[b])) == n_points

    # --- branch 2: fewer non-zero points than requested -> WITH replacement --
    n_points2 = 48
    out2 = random_point_sampling(pred_cloud, k_sample, n_points2,
                                 partial_cloud=partial_cloud)
    jax.block_until_ready(out2)
    assert out2.shape == (B, n_points2, 3)
    assert bool(jnp.all(jnp.any(out2 != 0.0, axis=-1)))
    d2 = jnp.abs(out2[:, :, None, :] - cloud[:, None, :, :]).max(-1)
    assert bool(jnp.all(d2.min(-1) < 1e-5))

    print("KERNEL_OK")
</pallas_src>

<mosaic_0001>
module attributes {stable_mosaic.version = 11 : i64} {
  func.func @_sampling_kernel(%arg0: i32, %arg1: memref<1x3x256xf32, #tpu.memory_space<vmem>>, %arg2: memref<1x1x256xi32, #tpu.memory_space<vmem>>, %arg3: memref<1x1x16xf32, #tpu.memory_space<vmem>>, %arg4: memref<1x3x16xf32, #tpu.memory_space<vmem>>, %arg5: memref<1x256xi32, #tpu.memory_space<vmem>>) attributes {dimension_semantics = [#tpu.dimension_semantics<parallel>], iteration_bounds = array<i64: 2>, scalar_prefetch = 0 : i64, scratch_operands = 1 : i64, tpu.core_type = #tpu.core_type<tc>, window_params = [{transform_indices = @transform_0, window_bounds = array<i64: 1, 3, 256>}, {transform_indices = @transform_1, window_bounds = array<i64: 1, 1, 256>}, {transform_indices = @transform_2, window_bounds = array<i64: 1, 1, 16>}, {transform_indices = @transform_3, window_bounds = array<i64: 1, 3, 16>}]} {
    %c0 = arith.constant 0 : index
    %c0_0 = arith.constant 0 : index
    %c0_1 = arith.constant 0 : index
    %0 = vector.load %arg1[%c0, %c0_0, %c0_1] : memref<1x3x256xf32, #tpu.memory_space<vmem>>, vector<1x3x256xf32>
    %1 = vector.shape_cast %0 : vector<1x3x256xf32> to vector<3x256xf32>
    %cst = arith.constant dense<0.000000e+00> : vector<256xf32>
    %2 = vector.multi_reduction <add>, %1, %cst [0] : vector<3x256xf32> to vector<256xf32>
    %3 = vector.shape_cast %2 : vector<256xf32> to vector<1x256xf32>
    %cst_2 = arith.constant 0.000000e+00 : f32
    %4 = vector.broadcast %cst_2 : f32 to vector<1x256xf32>
    %5 = arith.cmpf one, %3, %4 : vector<1x256xf32>
    %6 = arith.extui %5 : vector<1x256xi1> to vector<1x256xi32>
    %7 = vector.shape_cast %6 : vector<1x256xi32> to vector<1x1x256xi32>
    %cst_3 = arith.constant dense<0> : vector<1xi32>
    %8 = vector.multi_reduction <add>, %7, %cst_3 [1, 2] : vector<1x1x256xi32> to vector<1xi32>
    %9 = vector.shape_cast %8 : vector<1xi32> to vector<1x1x1xi32>
    %10 = vector.extract %9[0, 0, 0] : i32 from vector<1x1x1xi32>
    %c0_4 = arith.constant 0 : index
    %c0_5 = arith.constant 0 : index
    %c0_6 = arith.constant 0 : index
    %11 = vector.load %arg2[%c0_4, %c0_5, %c0_6] : memref<1x1x256xi32, #tpu.memory_space<vmem>>, vector<1x1x256xi32>
    %12 = vector.shape_cast %11 : vector<1x1x256xi32> to vector<1x256xi32>
    %c0_i32 = arith.constant 0 : i32
    %c256_i32 = arith.constant 256 : i32
    %13 = vector.broadcast %c0_i32 : i32 to vector<1x256xi32>
    %14 = vector.broadcast %c256_i32 : i32 to vector<1x256xi32>
    %15 = arith.select %5, %13, %14 : vector<1x256xi1>, vector<1x256xi32>
    %16 = arith.addi %12, %15 : vector<1x256xi32>
    %c0_7 = arith.constant 0 : index
    %c0_8 = arith.constant 0 : index
    %17 = vector.load %arg5[%c0_7, %c0_8] : memref<1x256xi32, #tpu.memory_space<vmem>>, vector<1x256xi32>
    tpu.vector_store %arg5[%c0_7, %c0_8], %16 {strides = array<i32>} : memref<1x256xi32, #tpu.memory_space<vmem>>, vector<1x256xi32>,
    %18 = tpu.iota {dimensions = array<i32: 1>} : vector<1x16xi32>
    %c0_9 = arith.constant 0 : index
    %c0_10 = arith.constant 0 : index
    %c0_11 = arith.constant 0 : index
    %19 = vector.load %arg3[%c0_9, %c0_10, %c0_11] : memref<1x1x16xf32, #tpu.memory_space<vmem>>, vector<1x1x16xf32>
    %20 = vector.shape_cast %19 : vector<1x1x16xf32> to vector<1x16xf32>
    %21 = arith.sitofp %10 : i32 to f32
    %22 = vector.broadcast %21 : f32 to vector<1x16xf32>
    %23 = arith.mulf %20, %22 : vector<1x16xf32>
    %24 = math.floor %23 : vector<1x16xf32>
    %25 = arith.fptosi %24 : vector<1x16xf32> to vector<1x16xi32>
    %c0_i32_12 = arith.constant 0 : i32
    %26 = vector.broadcast %c0_i32_12 : i32 to vector<1x16xi32>
    %27 = arith.maxsi %25, %26 : vector<1x16xi32>
    %c1_i32 = arith.constant 1 : i32
    %28 = arith.subi %10, %c1_i32 : i32
    %c0_i32_13 = arith.constant 0 : i32
    %29 = arith.maxsi %28, %c0_i32_13 : i32
    %30 = vector.broadcast %29 : i32 to vector<1x16xi32>
    %31 = arith.minsi %27, %30 : vector<1x16xi32>
    %c16_i32 = arith.constant 16 : i32
    %32 = arith.cmpi sge, %10, %c16_i32 : i32
    %33 = arith.select %32, %18, %31 : vector<1x16xi32>
    %cst_14 = arith.constant 0.000000e+00 : f32
    %34 = vector.broadcast %cst_14 : f32 to vector<3x16xf32>
    %c0_i32_15 = arith.constant 0 : i32
    %c256_i32_16 = arith.constant 256 : i32
    %35 = arith.muli %c0_i32_15, %c256_i32_16 : i32
    %36 = tpu.assume_multiple %35, 256 : i32
    %c0_17 = arith.constant 0 : index
    %37 = arith.index_cast %36 : i32 to index
    %38 = vector.load %arg5[%c0_17, %37] : memref<1x256xi32, #tpu.memory_space<vmem>>, vector<1x256xi32>
    %39 = vector.shape_cast %38 : vector<1x256xi32> to vector<1x256xi32>
    %40 = vector.broadcast %39 : vector<1x256xi32> to vector<256x256xi32>
    %41 = tpu.transpose %40, [1, 0] : vector<256x256xi32> -> vector<256x256xi32>
    %42 = vector.extract_strided_slice %41 {offsets = [0, 0], sizes = [256, 1], strides = [1, 1]} : vector<256x256xi32> to vector<256x1xi32>
    %c0_i32_18 = arith.constant 0 : i32
    %43 = vector.broadcast %c0_i32_18 : i32 to vector<256x1xi32>
    %c0_i32_19 = arith.constant 0 : i32
    %c256_i32_20 = arith.constant 256 : i32
    %44 = arith.muli %c0_i32_19, %c256_i32_20 : i32
    %45 = tpu.assume_multiple %44, 256 : i32
    %c0_21 = arith.constant 0 : index
    %46 = arith.index_cast %45 : i32 to index
    %47 = vector.load %arg5[%c0_21, %46] : memref<1x256xi32, #tpu.memory_space<vmem>>, vector<1x256xi32>
    %48 = vector.broadcast %47 : vector<1x256xi32> to vector<256x256xi32>
    %49 = vector.broadcast %42 : vector<256x1xi32> to vector<256x256xi32>
    %50 = arith.cmpi slt, %48, %49 : vector<256x256xi32>
    %51 = arith.extui %50 : vector<256x256xi1> to vector<256x256xi32>
    %cst_22 = arith.constant dense<0> : vector<256xi32>
    %52 = vector.multi_reduction <add>, %51, %cst_22 [1] : vector<256x256xi32> to vector<256xi32>
    %53 = vector.shape_cast %52 : vector<256xi32> to vector<256x1xi32>
    %54 = arith.addi %43, %53 : vector<256x1xi32>
    %c1_i32_23 = arith.constant 1 : i32
    %55 = vector.broadcast %54 : vector<256x1xi32> to vector<256x16xi32>
    %56 = vector.broadcast %33 : vector<1x16xi32> to vector<256x16xi32>
    %57 = arith.cmpi eq, %55, %56 : vector<256x16xi32>
    %58 = arith.extui %57 : vector<256x16xi1> to vector<256x16xi32>
    %59 = arith.sitofp %58 : vector<256x16xi32> to vector<256x16xf32>
    %c0_24 = arith.constant 0 : index
    %c0_25 = arith.constant 0 : index
    %60 = arith.index_cast %36 : i32 to index
    %61 = vector.load %arg1[%c0_24, %c0_25, %60] : memref<1x3x256xf32, #tpu.memory_space<vmem>>, vector<1x3x256xf32>
    %62 = vector.shape_cast %61 : vector<1x3x256xf32> to vector<3x256xf32>
    %cst_26 = arith.constant dense<0.000000e+00> : vector<3x16xf32>
    %63 = tpu.matmul %62, %59, %cst_26 {dimension_numbers = #tpu.dot_dimension_numbers<[1], [0], [0], [1], [0, 0, 1, 1], [], []>} : vector<3x256xf32>, vector<256x16xf32>, vector<3x16xf32> -> vector<3x16xf32>
    %64 = arith.addf %34, %63 : vector<3x16xf32>
    %c1_i32_27 = arith.constant 1 : i32
    %c0_28 = arith.constant 0 : index
    %c0_29 = arith.constant 0 : index
    %c0_30 = arith.constant 0 : index
    %65 = vector.load %arg4[%c0_28, %c0_29, %c0_30] : memref<1x3x16xf32, #tpu.memory_space<vmem>>, vector<1x3x16xf32>
    %66 = vector.shape_cast %65 : vector<1x3x16xf32> to vector<3x16xf32>
    %67 = vector.shape_cast %64 : vector<3x16xf32> to vector<1x3x16xf32>
    tpu.vector_store %arg4[%c0_28, %c0_29, %c0_30], %67 {strides = array<i32>} : memref<1x3x16xf32, #tpu.memory_space<vmem>>, vector<1x3x16xf32>,
    return
  }
  func.func @transform_0(%arg0: i32) -> (i32, i32, i32) {
    %c0_i32 = arith.constant 0 : i32
    %c0_i32_0 = arith.constant 0 : i32
    %c0_i32_1 = arith.constant 0 : i32
    return %arg0, %c0_i32, %c0_i32_0 : i32, i32, i32
  }
  func.func @transform_1(%arg0: i32) -> (i32, i32, i32) {
    %c0_i32 = arith.constant 0 : i32
    %c0_i32_0 = arith.constant 0 : i32
    %c0_i32_1 = arith.constant 0 : i32
    return %arg0, %c0_i32, %c0_i32_0 : i32, i32, i32
  }
  func.func @transform_2(%arg0: i32) -> (i32, i32, i32) {
    %c0_i32 = arith.constant 0 : i32
    %c0_i32_0 = arith.constant 0 : i32
    %c0_i32_1 = arith.constant 0 : i32
    return %arg0, %c0_i32, %c0_i32_0 : i32, i32, i32
  }
  func.func @transform_3(%arg0: i32) -> (i32, i32, i32) {
    %c0_i32 = arith.constant 0 : i32
    %c0_i32_0 = arith.constant 0 : i32
    %c0_i32_1 = arith.constant 0 : i32
    return %arg0, %c0_i32, %c0_i32_0 : i32, i32, i32
  }
}

</mosaic_0001>

<llo_original>
// kernel: _random_point_sampling_impl.1
$region0: #{_random_point_sampling_impl.1}
  #allocation0 [shape = 'u32[]', space=smem, size = 0x4, offset = 0x4, fixed_abs, tag = 'smem constant byte address 0x4 - core index']
  #allocation1 [shape = 'u32[144,128]{1,0:T(1,128)}', space=vmem, size = 0x12000, scoped, tag = 'internal scratch']
  #allocation2 [shape = 's32[1,256]{1,0:T(1,128)}', space=vmem, size = 0x400, scoped, tag = 'scratch operand']
  %s0 = inlined_call_operand.vmem [shape: f32[2,3,256], index: 0, kind: input, shape index: {}]
  %s1 = inlined_call_operand.vmem [shape: s32[2,1,256], index: 1, kind: input, shape index: {}]
  %s2 = inlined_call_operand.vmem [shape: f32[2,1,16], index: 2, kind: input, shape index: {}]
  %s3 = inlined_call_operand.vmem [shape: f32[2,3,16], index: 3, kind: output, shape index: {}]
  %s4 = sld [smem:[#allocation0]]
  $region45: #{_random_point_sampling_impl.1} parent=0
    _
  %s6 = ssub.s32 1, %s4
  %s7 = scalar_select 0, %s6, %s4
  loop: start=0, step=1, limit=4
  $region2: #{_random_point_sampling_impl.1} parent=0 // loop_pre_header
    _
  $region3: #{_random_point_sampling_impl.1} parent=0 // loop_header
    %s9 = sphi 0, %s13
    %p10 = scmp.ge.s32.totalorder %s9, 4
    %s19 = sphi 0, %s21
    %s22 = sphi 0, %s19
    %s23 = sphi 0, %s22
    %s39 = sphi 0, %s23
    %s45 = sphi 0, %s47
    %s48 = sphi 0, %s45
    %s49 = sphi 0, %s48
    %s65 = sphi 0, %s49
    %s71 = sphi 0, %s73
    %s74 = sphi 0, %s71
    %s75 = sphi 0, %s74
    %s91 = sphi 0, %s75
    %s97 = sphi 0, %s99
    %s100 = sphi 0, %s97
    %s101 = sphi 0, %s100
    %s117 = sphi 0, %s101
  $region4: #{_random_point_sampling_impl.1} parent=0 // loop_header_branch
    %12 = sbr.rel (%p10) target = $region8
  $region5: #{_random_point_sampling_impl.1} parent=0 // loop_body
    %s14 = ssub.s32 %s9, 1
    %s15 = ssub.s32 %s9, 2
    %s16 = sadd.s32 %s9, 1
    %s17 = ssub.s32 %s9, %s16
    %p18 = scmp.eq.s32.totalorder %s17, 0
    %s20 = sadd.s32 %s19, 1
    %s21 = scalar_select %p18, %s19, %s20
    %p24 = pneg %p18
    %p25 = scmp.eq.s32.totalorder %s9, 1
    %p26 = por %p24, %p25
    %p27 = scmp.ne.s32.totalorder %s19, %s22
    %p28 = scmp.eq.s32.totalorder %s9, 0
    %p29 = por %p27, %p28
    %p30 = scmp.ne.s32.totalorder %s19, %s22
    %p31 = scmp.eq.s32.totalorder %s14, 1
    %p32 = por %p30, %p31
    %p33 = scmp.ne.s32.totalorder %s22, %s23
    %p34 = scmp.eq.s32.totalorder %s14, 0
    %p35 = por %p33, %p34
    %p36 = scmp.ne.s32.totalorder %s22, %s23
    %p37 = scmp.eq.s32.totalorder %s15, 1
    %p38 = por %p36, %p37
    %p40 = scmp.ne.s32.totalorder %s23, %s39
    %p41 = scmp.eq.s32.totalorder %s15, 0
    %p42 = por %p40, %p41
    %s43 = ssub.s32 %s9, %s16
    %p44 = scmp.eq.s32.totalorder %s43, 0
    %s46 = sadd.s32 %s45, 1
    %s47 = scalar_select %p44, %s45, %s46
    %p50 = pneg %p44
    %p51 = scmp.eq.s32.totalorder %s9, 1
    %p52 = por %p50, %p51
    %p53 = scmp.ne.s32.totalorder %s45, %s48
    %p54 = scmp.eq.s32.totalorder %s9, 0
    %p55 = por %p53, %p54
    %p56 = scmp.ne.s32.totalorder %s45, %s48
    %p57 = scmp.eq.s32.totalorder %s14, 1
    %p58 = por %p56, %p57
    %p59 = scmp.ne.s32.totalorder %s48, %s49
    %p60 = scmp.eq.s32.totalorder %s14, 0
    %p61 = por %p59, %p60
    %p62 = scmp.ne.s32.totalorder %s48, %s49
    %p63 = scmp.eq.s32.totalorder %s15, 1
    %p64 = por %p62, %p63
    %p66 = scmp.ne.s32.totalorder %s49, %s65
    %p67 = scmp.eq.s32.totalorder %s15, 0
    %p68 = por %p66, %p67
    %s69 = ssub.s32 %s9, %s16
    %p70 = scmp.eq.s32.totalorder %s69, 0
    %s72 = sadd.s32 %s71, 1
    %s73 = scalar_select %p70, %s71, %s72
    %p76 = pneg %p70
    %p77 = scmp.eq.s32.totalorder %s9, 1
    %p78 = por %p76, %p77
    %p79 = scmp.ne.s32.totalorder %s71, %s74
    %p80 = scmp.eq.s32.totalorder %s9, 0
    %p81 = por %p79, %p80
    %p82 = scmp.ne.s32.totalorder %s71, %s74
    %p83 = scmp.eq.s32.totalorder %s14, 1
    %p84 = por %p82, %p83
    %p85 = scmp.ne.s32.totalorder %s74, %s75
    %p86 = scmp.eq.s32.totalorder %s14, 0
    %p87 = por %p85, %p86
    %p88 = scmp.ne.s32.totalorder %s74, %s75
    %p89 = scmp.eq.s32.totalorder %s15, 1
    %p90 = por %p88, %p89
    %p92 = scmp.ne.s32.totalorder %s75, %s91
    %p93 = scmp.eq.s32.totalorder %s15, 0
    %p94 = por %p92, %p93
    %s95 = ssub.s32 %s9, %s16
    %p96 = scmp.eq.s32.totalorder %s95, 0
    %s98 = sadd.s32 %s97, 1
    %s99 = scalar_select %p96, %s97, %s98
    %p102 = pneg %p96
    %p103 = scmp.eq.s32.totalorder %s9, 1
    %p104 = por %p102, %p103
    %p105 = scmp.ne.s32.totalorder %s97, %s100
    %p106 = scmp.eq.s32.totalorder %s9, 0
    %p107 = por %p105, %p106
    %p108 = scmp.ne.s32.totalorder %s97, %s100
    %p109 = scmp.eq.s32.totalorder %s14, 1
    %p110 = por %p108, %p109
    %p111 = scmp.ne.s32.totalorder %s100, %s101
    %p112 = scmp.eq.s32.totalorder %s14, 0
    %p113 = por %p111, %p112
    %p114 = scmp.ne.s32.totalorder %s100, %s101
    %p115 = scmp.eq.s32.totalorder %s15, 1
    %p116 = por %p114, %p115
    %p118 = scmp.ne.s32.totalorder %s101, %s117
    %p119 = scmp.eq.s32.totalorder %s15, 0
    %p120 = por %p118, %p119
    %p121 = scmp.le.s32.totalorder 1, %s9
    %p122 = scmp.lt.s32.totalorder %s9, 3
    %p123 = pnand %p121, %p122
    %p124 = pneg %p123
    // Predicated region
    $region9: #{_random_point_sampling_impl.1} parent=5 // pred_check
      _
    $region10: #{_random_point_sampling_impl.1} parent=5 // pred_check_branch
      %126 = sbr.rel (%p123) target = $region12
    $region11: #{_random_point_sampling_impl.1} parent=5 // pred_region
      %s127 = ssub.s32 %s9, 1
    $region12: #{_random_point_sampling_impl.1} parent=5 // pred_fallthru
      _
    %p128 = scmp.lt.s32.totalorder %s9, 2
    // Predicated region
    $region13: #{_random_point_sampling_impl.1} parent=5 // pred_check
      %p129 = pneg %p128
    $region14: #{_random_point_sampling_impl.1} parent=5 // pred_check_branch
      %131 = sbr.rel (%p129) target = $region16
    $region15: #{_random_point_sampling_impl.1} parent=5 // pred_region
      // Predicated region
      $region17: #{_random_point_sampling_impl.1} parent=15 // pred_check
        %p132 = pneg %p29
      $region18: #{_random_point_sampling_impl.1} parent=15 // pred_check_branch
        %134 = sbr.rel (%p132) target = $region20
      $region19: #{_random_point_sampling_impl.1} parent=15 // pred_region
        %p135 = scmp.lt.s32.totalorder %s9, 1
        %s136 = scalar_select %p135, %s9, 1
        %s137 = smul.addr %s136, 2
        %s138 = smul.addr %s137, 4
        %s139 = scalar_lea.vmem %s0, %s138
      $region20: #{_random_point_sampling_impl.1} parent=15 // pred_fallthru
        _
      // Predicated region
      $region21: #{_random_point_sampling_impl.1} parent=15 // pred_check
        %p140 = pneg %p55
      $region22: #{_random_point_sampling_impl.1} parent=15 // pred_check_branch
        %142 = sbr.rel (%p140) target = $region24
      $region23: #{_random_point_sampling_impl.1} parent=15 // pred_region
        %p143 = scmp.lt.s32.totalorder %s9, 1
        %s144 = scalar_select %p143, %s9, 1
        %s145 = smul.addr %s144, 2
        %s146 = scalar_lea.vmem %s1, %s145
      $region24: #{_random_point_sampling_impl.1} parent=15 // pred_fallthru
        _
      // Predicated region
      $region25: #{_random_point_sampling_impl.1} parent=15 // pred_check
        %p147 = pneg %p81
      $region26: #{_random_point_sampling_impl.1} parent=15 // pred_check_branch
        %149 = sbr.rel (%p147) target = $region28
      $region27: #{_random_point_sampling_impl.1} parent=15 // pred_region
        %p150 = scmp.lt.s32.totalorder %s9, 1
        %s151 = scalar_select %p150, %s9, 1
        %s152 = scalar_lea.vmem %s2, %s151
      $region28: #{_random_point_sampling_impl.1} parent=15 // pred_fallthru
        _
    $region16: #{_random_point_sampling_impl.1} parent=5 // pred_fallthru
      _
    %p153 = scmp.le.s32.totalorder 1, %s9
    %p154 = scmp.lt.s32.totalorder %s9, 3
    %p155 = pnand %p153, %p154
    %p156 = pneg %p155
    // Predicated region
    $region29: #{_random_point_sampling_impl.1} parent=5 // pred_check
      _
    $region30: #{_random_point_sampling_impl.1} parent=5 // pred_check_branch
      %158 = sbr.rel (%p155) target = $region32
    $region31: #{_random_point_sampling_impl.1} parent=5 // pred_region
      %s159 = ssub.s32 %s9, 1
      %p160 = scmp.lt.s32.totalorder %s14, 1
      %s161 = scalar_select %p160, %s14, 1
      %s162 = smul.addr %s161, 2
      %s163 = smul.addr %s162, 4
      %s164 = scalar_lea.vmem %s0, %s163
      %p165 = pneg %p35
      %p166 = pneg %p32
      %p167 = scmp.lt.s32.totalorder %s14, 1
      %s168 = scalar_select %p167, %s14, 1
      %s169 = smul.addr %s168, 2
      %s170 = scalar_lea.vmem %s1, %s169
      %p171 = pneg %p61
      %p172 = pneg %p58
      %p173 = scmp.lt.s32.totalorder %s14, 1
      %s174 = scalar_select %p173, %s14, 1
      %s175 = scalar_lea.vmem %s2, %s174
      %p176 = pneg %p87
      %p177 = pneg %p84
      %p178 = pneg %p113
      %p179 = pneg %p110
      %p180 = scmp.lt.s32.totalorder %s14, 1
      %s181 = scalar_select %p180, %s14, 1
      %s182 = smul.addr %s181, 4
      %s183 = scalar_lea.vmem %s3, %s182
      %p184 = scmp.lt.s32.totalorder %s14, 1
      %s185 = scalar_select %p184, %s14, 1
      %s186 = smul.addr %s185, 2
      %s187 = smul.addr %s186, 4
      %s188 = scalar_lea.vmem %s0, %s187
      %p189 = scmp.lt.s32.totalorder %s14, 1
      %s190 = scalar_select %p189, %s14, 1
      %s191 = smul.addr %s190, 2
      %s192 = scalar_lea.vmem %s1, %s191
      %p193 = scmp.lt.s32.totalorder %s14, 1
      %s194 = scalar_select %p193, %s14, 1
      %s195 = scalar_lea.vmem %s2, %s194
      %p196 = scmp.lt.s32.totalorder %s14, 1
      %s197 = scalar_select %p196, %s14, 1
      %s198 = smul.addr %s197, 4
      %s199 = scalar_lea.vmem %s3, %s198
      %v200 = vld [vmem:[%s188] sm:$0x77]
      %v202 = vcombine.high %v200, %v200
      %vm204 = vcmask 1042432
      %v205 = vsel %vm204, %v200, 0.0
      %v206 = vrot.slane %v205, 4
      %v207 = vadd.f32 %v205, %v206
      %v208 = vrot.slane %v207, 2
      %v209 = vadd.f32 %v207, %v208
      %v210 = vrot.slane %v209, 1
      %v211 = vadd.f32 %v209, %v210
      %v212 = vsel %vm204, %v202, 0.0
      %v213 = vrot.slane %v212, 4
      %v214 = vadd.f32 %v212, %v213
      %v215 = vrot.slane %v214, 2
      %v216 = vadd.f32 %v214, %v215
      %v217 = vrot.slane %v216, 1
      %v218 = vadd.f32 %v216, %v217
      %vm219 = vcmp.ne.f32.partialorder %v211, 0.0
      %vm220 = vcmp.ne.f32.partialorder %v218, 0.0
      %v221 = vsel %vm219, 1, 0
      %v222 = vsel %vm220, 1, 0
      %v223 = vadd.s32 %v221, %v222
      %v224 = vand.u32 %v223, 65535
      %v225 = vshrl.u32 %v223, 16
      %v226 = vcvt.s32.f32 %v224
      %v227 = vcvt.s32.f32 %v225
      %228 = vadd.xlane.f32.xlu0 %v226
      %v229 = vpop.xlane.xlu0 %228
      %230 = vadd.xlane.f32.xlu0 %v227
      %v231 = vpop.xlane.xlu0 %230
      %v232 = vcvt.f32.s32 %v229
      %v233 = vcvt.f32.s32 %v231
      %v234 = vshll.u32 %v233, 16
      %v235 = vadd.s32 %v234, %v232
      %s236 = vtos %v235
      %v237 = vld [vmem:[%s192] sm:$0x3]
      %v238 = vsel %vm219, 0, 256
      %v239 = vsel %vm220, 0, 256
      %v240 = vcombine.low %v238, %v239
      %v242 = vunpack.c.l.s4 1966171168
      %v243 = vunpack.c.0.s8 %v242
      %v244 = vlaneseq
      %v245 = vshrl.u32 %v244, 7
      %v246 = vsub.s32 %v243, %v245
      %v247 = vrot.slane %v240, %v246
      %v249 = vunpack.c.l.s4 1966171168
      %v250 = vunpack.c.0.s8 %v249
      %v251 = vlaneseq
      %v252 = vshrl.u32 %v251, 7
      %v253 = vsub.s32 %v250, %v252
      %v254 = vrot.slane %v247, %v253
      %v255 = vadd.s32 %v237, %v254
      %v256 = vlaneseq
      %vm257 = vcmp.ge.s32.totalorder %v256, 0
      %vm258 = vcmp.lt.s32.totalorder %v256, 256
      %vm259 = vmand %vm257, %vm258
      %260 = vst.msk [vmem:[#allocation2] sm:$0x3] %vm259, %v255
      %v261 = vlaneseq
      %v262 = vand.u32 %v261, 127
      %v263 = vld [vmem:[%s195] sm:$0x1]
      %s264 = scvt.s32.f32 %s236
      %v265 = vstv %s264
      %v266 = vmul.f32 %v263, %v265
      %v267 = vfloor.f32 %v266
      %v268 = vcvt.f32.s32.to.zero.pseudo %v267
      %vm269 = vcmp.gt.s32.totalorder %v268, 0
      %v270 = vsel %vm269, %v268, 0
      %s271 = ssub.s32 %s236, 1
      %p272 = scmp.gt.s32.totalorder %s271, 0
      %s273 = scalar_select %p272, %s271, 0
      %v274 = vstv %s273
      %vm275 = vcmp.lt.s32.totalorder %v270, %v274
      %v276 = vsel %vm275, %v270, %v274
      %p277 = scmp.ge.s32.totalorder %s236, 16
      %s278 = scalar_select %p277, 1, 0
      %v279 = vstv %s278
      %vm280 = vcmp.eq.s32.totalorder %v279, 1
      %v281 = vsel %vm280, %v262, %v276
      %v282 = vld [vmem:[#allocation2] sm:$0x3]
      %v283 = vlaneseq
      %v284 = vshrl.u32 %v283, 7
      %v285 = vsub.s32 0, %v284
      %v286 = vrot.slane %v282, %v285
      %v287 = vlaneseq
      %v288 = vshrl.u32 %v287, 7
      %v289 = vsub.s32 1, %v288
      %v290 = vrot.slane %v282, %v289
      %291 = vxpose.xlu0.b32.start [1/16] %v286, 128
      %292 = vxpose.xlu0.b32.cont [2/16] %v286, 128
      %293 = vxpose.xlu0.b32.cont [3/16] %v286, 128
      %294 = vxpose.xlu0.b32.cont [4/16] %v286, 128
      %295 = vxpose.xlu0.b32.cont [5/16] %v286, 128
      %296 = vxpose.xlu0.b32.cont [6/16] %v286, 128
      %297 = vxpose.xlu0.b32.cont [7/16] %v286, 128
      %298 = vxpose.xlu0.b32.cont [8/16] %v286, 128
      %299 = vxpose.xlu0.b32.cont [9/16] %v286, 128
      %300 = vxpose.xlu0.b32.cont [10/16] %v286, 128
      %301 = vxpose.xlu0.b32.cont [11/16] %v286, 128
      %302 = vxpose.xlu0.b32.cont [12/16] %v286, 128
      %303 = vxpose.xlu0.b32.cont [13/16] %v286, 128
      %304 = vxpose.xlu0.b32.cont [14/16] %v286, 128
      %305 = vxpose.xlu0.b32.cont [15/16] %v286, 128
      %306 = vxpose.xlu0.b32.end [16/16] %v286, 128
      %v307 = vpop.trf.xlu0
      %v308 = vpop.trf.xlu0
      %v309 = vpop.trf.xlu0
      %v310 = vpop.trf.xlu0
      %v311 = vpop.trf.xlu0
      %v312 = vpop.trf.xlu0
      %v313 = vpop.trf.xlu0
      %v314 = vpop.trf.xlu0
      %v315 = vpop.trf.xlu0
      %v316 = vpop.trf.xlu0
      %v317 = vpop.trf.xlu0
      %v318 = vpop.trf.xlu0
      %v319 = vpop.trf.xlu0
      %v320 = vpop.trf.xlu0
      %v321 = vpop.trf.xlu0
      %v322 = vpop.trf.xlu0
      %323 = vxpose.xlu0.b32.start [1/16] %v290, 128
      %324 = vxpose.xlu0.b32.cont [2/16] %v290, 128
      %325 = vxpose.xlu0.b32.cont [3/16] %v290, 128
      %326 = vxpose.xlu0.b32.cont [4/16] %v290, 128
      %327 = vxpose.xlu0.b32.cont [5/16] %v290, 128
      %328 = vxpose.xlu0.b32.cont [6/16] %v290, 128
      %329 = vxpose.xlu0.b32.cont [7/16] %v290, 128
      %330 = vxpose.xlu0.b32.cont [8/16] %v290, 128
      %331 = vxpose.xlu0.b32.cont [9/16] %v290, 128
      %332 = vxpose.xlu0.b32.cont [10/16] %v290, 128
      %333 = vxpose.xlu0.b32.cont [11/16] %v290, 128
      %334 = vxpose.xlu0.b32.cont [12/16] %v290, 128
      %335 = vxpose.xlu0.b32.cont [13/16] %v290, 128
      %336 = vxpose.xlu0.b32.cont [14/16] %v290, 128
      %337 = vxpose.xlu0.b32.cont [15/16] %v290, 128
      %338 = vxpose.xlu0.b32.end [16/16] %v290, 128
      %v339 = vpop.trf.xlu0
      %v340 = vpop.trf.xlu0
      %v341 = vpop.trf.xlu0
      %v342 = vpop.trf.xlu0
      %v343 = vpop.trf.xlu0
      %v344 = vpop.trf.xlu0
      %v345 = vpop.trf.xlu0
      %v346 = vpop.trf.xlu0
      %v347 = vpop.trf.xlu0
      %v348 = vpop.trf.xlu0
      %v349 = vpop.trf.xlu0
      %v350 = vpop.trf.xlu0
      %v351 = vpop.trf.xlu0
      %v352 = vpop.trf.xlu0
      %v353 = vpop.trf.xlu0
      %v354 = vpop.trf.xlu0
      %355 = vset.pattern.permute.xlu0 0
      %356 = vperm.xlu0 %355, %v307
      %v357 = vpop.permute.xlu0 %356
      %358 = vset.pattern.permute.xlu0 0
      %359 = vperm.xlu0 %358, %v308
      %v360 = vpop.permute.xlu0 %359
      %361 = vset.pattern.permute.xlu0 0
      %362 = vperm.xlu0 %361, %v309
      %v363 = vpop.permute.xlu0 %362
      %364 = vset.pattern.permute.xlu0 0
      %365 = vperm.xlu0 %364, %v310
      %v366 = vpop.permute.xlu0 %365
      %367 = vset.pattern.permute.xlu0 0
      %368 = vperm.xlu0 %367, %v311
      %v369 = vpop.permute.xlu0 %368
      %370 = vset.pattern.permute.xlu0 0
      %371 = vperm.xlu0 %370, %v312
      %v372 = vpop.permute.xlu0 %371
      %373 = vset.pattern.permute.xlu0 0
      %374 = vperm.xlu0 %373, %v313
      %v375 = vpop.permute.xlu0 %374
      %376 = vset.pattern.permute.xlu0 0
      %377 = vperm.xlu0 %376, %v314
      %v378 = vpop.permute.xlu0 %377
      %379 = vset.pattern.permute.xlu0 0
      %380 = vperm.xlu0 %379, %v315
      %v381 = vpop.permute.xlu0 %380
      %382 = vset.pattern.permute.xlu0 0
      %383 = vperm.xlu0 %382, %v316
      %v384 = vpop.permute.xlu0 %383
      %385 = vset.pattern.permute.xlu0 0
      %386 = vperm.xlu0 %385, %v317
      %v387 = vpop.permute.xlu0 %386
      %388 = vset.pattern.permute.xlu0 0
      %389 = vperm.xlu0 %388, %v318
      %v390 = vpop.permute.xlu0 %389
      %391 = vset.pattern.permute.xlu0 0
      %392 = vperm.xlu0 %391, %v319
      %v393 = vpop.permute.xlu0 %392
      %394 = vset.pattern.permute.xlu0 0
      %395 = vperm.xlu0 %394, %v320
      %v396 = vpop.permute.xlu0 %395
      %397 = vset.pattern.permute.xlu0 0
      %398 = vperm.xlu0 %397, %v321
      %v399 = vpop.permute.xlu0 %398
      %400 = vset.pattern.permute.xlu0 0
      %401 = vperm.xlu0 %400, %v322
      %v402 = vpop.permute.xlu0 %401
      %403 = vset.pattern.permute.xlu0 0
      %404 = vperm.xlu0 %403, %v339
      %v405 = vpop.permute.xlu0 %404
      %406 = vset.pattern.permute.xlu0 0
      %407 = vperm.xlu0 %406, %v340
      %v408 = vpop.permute.xlu0 %407
      %409 = vset.pattern.permute.xlu0 0
      %410 = vperm.xlu0 %409, %v341
      %v411 = vpop.permute.xlu0 %410
      %412 = vset.pattern.permute.xlu0 0
      %413 = vperm.xlu0 %412, %v342
      %v414 = vpop.permute.xlu0 %413
      %415 = vset.pattern.permute.xlu0 0
      %416 = vperm.xlu0 %415, %v343
      %v417 = vpop.permute.xlu0 %416
      %418 = vset.pattern.permute.xlu0 0
      %419 = vperm.xlu0 %418, %v344
      %v420 = vpop.permute.xlu0 %419
      %421 = vset.pattern.permute.xlu0 0
      %422 = vperm.xlu0 %421, %v345
      %v423 = vpop.permute.xlu0 %422
      %424 = vset.pattern.permute.xlu0 0
      %425 = vperm.xlu0 %424, %v346
      %v426 = vpop.permute.xlu0 %425
      %427 = vset.pattern.permute.xlu0 0
      %428 = vperm.xlu0 %427, %v347
      %v429 = vpop.permute.xlu0 %428
      %430 = vset.pattern.permute.xlu0 0
      %431 = vperm.xlu0 %430, %v348
      %v432 = vpop.permute.xlu0 %431
      %433 = vset.pattern.permute.xlu0 0
      %434 = vperm.xlu0 %433, %v349
      %v435 = vpop.permute.xlu0 %434
      %436 = vset.pattern.permute.xlu0 0
      %437 = vperm.xlu0 %436, %v350
      %v438 = vpop.permute.xlu0 %437
      %439 = vset.pattern.permute.xlu0 0
      %440 = vperm.xlu0 %439, %v351
      %v441 = vpop.permute.xlu0 %440
      %442 = vset.pattern.permute.xlu0 0
      %443 = vperm.xlu0 %442, %v352
      %v444 = vpop.permute.xlu0 %443
      %445 = vset.pattern.permute.xlu0 0
      %446 = vperm.xlu0 %445, %v353
      %v447 = vpop.permute.xlu0 %446
      %448 = vset.pattern.permute.xlu0 0
      %449 = vperm.xlu0 %448, %v354
      %v450 = vpop.permute.xlu0 %449
      %vm451 = vcmp.lt.s32.totalorder %v286, %v357
      %vm452 = vcmp.lt.s32.totalorder %v290, %v357
      %vm453 = vcmp.lt.s32.totalorder %v286, %v360
      %vm454 = vcmp.lt.s32.totalorder %v290, %v360
      %vm455 = vcmp.lt.s32.totalorder %v286, %v363
      %vm456 = vcmp.lt.s32.totalorder %v290, %v363
      %vm457 = vcmp.lt.s32.totalorder %v286, %v366
      %vm458 = vcmp.lt.s32.totalorder %v290, %v366
      %vm459 = vcmp.lt.s32.totalorder %v286, %v369
      %vm460 = vcmp.lt.s32.totalorder %v290, %v369
      %vm461 = vcmp.lt.s32.totalorder %v286, %v372
      %vm462 = vcmp.lt.s32.totalorder %v290, %v372
      %vm463 = vcmp.lt.s32.totalorder %v286, %v375
      %vm464 = vcmp.lt.s32.totalorder %v290, %v375
      %vm465 = vcmp.lt.s32.totalorder %v286, %v378
      %vm466 = vcmp.lt.s32.totalorder %v290, %v378
      %vm467 = vcmp.lt.s32.totalorder %v286, %v381
      %vm468 = vcmp.lt.s32.totalorder %v290, %v381
      %vm469 = vcmp.lt.s32.totalorder %v286, %v384
      %vm470 = vcmp.lt.s32.totalorder %v290, %v384
      %vm471 = vcmp.lt.s32.totalorder %v286, %v387
      %vm472 = vcmp.lt.s32.totalorder %v290, %v387
      %vm473 = vcmp.lt.s32.totalorder %v286, %v390
      %vm474 = vcmp.lt.s32.totalorder %v290, %v390
      %vm475 = vcmp.lt.s32.totalorder %v286, %v393
      %vm476 = vcmp.lt.s32.totalorder %v290, %v393
      %vm477 = vcmp.lt.s32.totalorder %v286, %v396
      %vm478 = vcmp.lt.s32.totalorder %v290, %v396
      %vm479 = vcmp.lt.s32.totalorder %v286, %v399
      %vm480 = vcmp.lt.s32.totalorder %v290, %v399
      %vm481 = vcmp.lt.s32.totalorder %v286, %v402
      %vm482 = vcmp.lt.s32.totalorder %v290, %v402
      %vm483 = vcmp.lt.s32.totalorder %v286, %v405
      %vm484 = vcmp.lt.s32.totalorder %v290, %v405
      %vm485 = vcmp.lt.s32.totalorder %v286, %v408
      %vm486 = vcmp.lt.s32.totalorder %v290, %v408
      %vm487 = vcmp.lt.s32.totalorder %v286, %v411
      %vm488 = vcmp.lt.s32.totalorder %v290, %v411
      %vm489 = vcmp.lt.s32.totalorder %v286, %v414
      %vm490 = vcmp.lt.s32.totalorder %v290, %v414
      %vm491 = vcmp.lt.s32.totalorder %v286, %v417
      %vm492 = vcmp.lt.s32.totalorder %v290, %v417
      %vm493 = vcmp.lt.s32.totalorder %v286, %v420
      %vm494 = vcmp.lt.s32.totalorder %v290, %v420
      %vm495 = vcmp.lt.s32.totalorder %v286, %v423
      %vm496 = vcmp.lt.s32.totalorder %v290, %v423
      %vm497 = vcmp.lt.s32.totalorder %v286, %v426
      %vm498 = vcmp.lt.s32.totalorder %v290, %v426
      %vm499 = vcmp.lt.s32.totalorder %v286, %v429
      %vm500 = vcmp.lt.s32.totalorder %v290, %v429
      %vm501 = vcmp.lt.s32.totalorder %v286, %v432
      %vm502 = vcmp.lt.s32.totalorder %v290, %v432
      %vm503 = vcmp.lt.s32.totalorder %v286, %v435
      %vm504 = vcmp.lt.s32.totalorder %v290, %v435
      %vm505 = vcmp.lt.s32.totalorder %v286, %v438
      %vm506 = vcmp.lt.s32.totalorder %v290, %v438
      %vm507 = vcmp.lt.s32.totalorder %v286, %v441
      %vm508 = vcmp.lt.s32.totalorder %v290, %v441
      %vm509 = vcmp.lt.s32.totalorder %v286, %v444
      %vm510 = vcmp.lt.s32.totalorder %v290, %v444
      %vm511 = vcmp.lt.s32.totalorder %v286, %v447
      %vm512 = vcmp.lt.s32.totalorder %v290, %v447
      %vm513 = vcmp.lt.s32.totalorder %v286, %v450
      %vm514 = vcmp.lt.s32.totalorder %v290, %v450
      %v515 = vsel %vm451, 1, 0
      %v516 = vsel %vm452, 1, 0
      %v517 = vsel %vm453, 1, 0
      %v518 = vsel %vm454, 1, 0
      %v519 = vsel %vm455, 1, 0
      %v520 = vsel %vm456, 1, 0
      %v521 = vsel %vm457, 1, 0
      %v522 = vsel %vm458, 1, 0
      %v523 = vsel %vm459, 1, 0
      %v524 = vsel %vm460, 1, 0
      %v525 = vsel %vm461, 1, 0
      %v526 = vsel %vm462, 1, 0
      %v527 = vsel %vm463, 1, 0
      %v528 = vsel %vm464, 1, 0
      %v529 = vsel %vm465, 1, 0
      %v530 = vsel %vm466, 1, 0
      %v531 = vsel %vm467, 1, 0
      %v532 = vsel %vm468, 1, 0
      %v533 = vsel %vm469, 1, 0
      %v534 = vsel %vm470, 1, 0
      %v535 = vsel %vm471, 1, 0
      %v536 = vsel %vm472, 1, 0
      %v537 = vsel %vm473, 1, 0
      %v538 = vsel %vm474, 1, 0
      %v539 = vsel %vm475, 1, 0
      %v540 = vsel %vm476, 1, 0
      %v541 = vsel %vm477, 1, 0
      %v542 = vsel %vm478, 1, 0
      %v543 = vsel %vm479, 1, 0
      %v544 = vsel %vm480, 1, 0
      %v545 = vsel %vm481, 1, 0
      %v546 = vsel %vm482, 1, 0
      %v547 = vsel %vm483, 1, 0
      %v548 = vsel %vm484, 1, 0
      %v549 = vsel %vm485, 1, 0
      %v550 = vsel %vm486, 1, 0
      %v551 = vsel %vm487, 1, 0
      %v552 = vsel %vm488, 1, 0
      %v553 = vsel %vm489, 1, 0
      %v554 = vsel %vm490, 1, 0
      %v555 = vsel %vm491, 1, 0
      %v556 = vsel %vm492, 1, 0
      %v557 = vsel %vm493, 1, 0
      %v558 = vsel %vm494, 1, 0
      %v559 = vsel %vm495, 1, 0
      %v560 = vsel %vm496, 1, 0
      %v561 = vsel %vm497, 1, 0
      %v562 = vsel %vm498, 1, 0
      %v563 = vsel %vm499, 1, 0
      %v564 = vsel %vm500, 1, 0
      %v565 = vsel %vm501, 1, 0
      %v566 = vsel %vm502, 1, 0
      %v567 = vsel %vm503, 1, 0
      %v568 = vsel %vm504, 1, 0
      %v569 = vsel %vm505, 1, 0
      %v570 = vsel %vm506, 1, 0
      %v571 = vsel %vm507, 1, 0
      %v572 = vsel %vm508, 1, 0
      %v573 = vsel %vm509, 1, 0
      %v574 = vsel %vm510, 1, 0
      %v575 = vsel %vm511, 1, 0
      %v576 = vsel %vm512, 1, 0
      %v577 = vsel %vm513, 1, 0
      %v578 = vsel %vm514, 1, 0
      %v579 = vadd.s32 %v515, %v516
      %v580 = vand.u32 %v579, 65535
      %v581 = vshrl.u32 %v579, 16
      %v582 = vcvt.s32.f32 %v580
      %v583 = vcvt.s32.f32 %v581
      %584 = vadd.xlane.f32.xlu0 %v582
      %v585 = vpop.xlane.xlu0 %584
      %586 = vadd.xlane.f32.xlu0 %v583
      %v587 = vpop.xlane.xlu0 %586
      %v588 = vcvt.f32.s32 %v585
      %v589 = vcvt.f32.s32 %v587
      %v590 = vshll.u32 %v589, 16
      %v591 = vadd.s32 %v590, %v588
      %v592 = vadd.s32 %v517, %v518
      %v593 = vand.u32 %v592, 65535
      %v594 = vshrl.u32 %v592, 16
      %v595 = vcvt.s32.f32 %v593
      %v596 = vcvt.s32.f32 %v594
      %597 = vadd.xlane.f32.xlu0 %v595
      %v598 = vpop.xlane.xlu0 %597
      %599 = vadd.xlane.f32.xlu0 %v596
      %v600 = vpop.xlane.xlu0 %599
      %v601 = vcvt.f32.s32 %v598
      %v602 = vcvt.f32.s32 %v600
      %v603 = vshll.u32 %v602, 16
      %v604 = vadd.s32 %v603, %v601
      %v605 = vadd.s32 %v519, %v520
      %v606 = vand.u32 %v605, 65535
      %v607 = vshrl.u32 %v605, 16
      %v608 = vcvt.s32.f32 %v606
      %v609 = vcvt.s32.f32 %v607
      %610 = vadd.xlane.f32.xlu0 %v608
      %v611 = vpop.xlane.xlu0 %610
      %612 = vadd.xlane.f32.xlu0 %v609
      %v613 = vpop.xlane.xlu0 %612
      %v614 = vcvt.f32.s32 %v611
      %v615 = vcvt.f32.s32 %v613
      %v616 = vshll.u32 %v615, 16
      %v617 = vadd.s32 %v616, %v614
      %v618 = vadd.s32 %v521, %v522
      %v619 = vand.u32 %v618, 65535
      %v620 = vshrl.u32 %v618, 16
      %v621 = vcvt.s32.f32 %v619
      %v622 = vcvt.s32.f32 %v620
      %623 = vadd.xlane.f32.xlu0 %v621
      %v624 = vpop.xlane.xlu0 %623
      %625 = vadd.xlane.f32.xlu0 %v622
      %v626 = vpop.xlane.xlu0 %625
      %v627 = vcvt.f32.s32 %v624
      %v628 = vcvt.f32.s32 %v626
      %v629 = vshll.u32 %v628, 16
      %v630 = vadd.s32 %v629, %v627
      %v631 = vadd.s32 %v523, %v524
      %v632 = vand.u32 %v631, 65535
      %v633 = vshrl.u32 %v631, 16
      %v634 = vcvt.s32.f32 %v632
      %v635 = vcvt.s32.f32 %v633
      %636 = vadd.xlane.f32.xlu0 %v634
      %v637 = vpop.xlane.xlu0 %636
      %638 = vadd.xlane.f32.xlu0 %v635
      %v639 = vpop.xlane.xlu0 %638
      %v640 = vcvt.f32.s32 %v637
      %v641 = vcvt.f32.s32 %v639
      %v642 = vshll.u32 %v641, 16
      %v643 = vadd.s32 %v642, %v640
      %v644 = vadd.s32 %v525, %v526
      %v645 = vand.u32 %v644, 65535
      %v646 = vshrl.u32 %v644, 16
      %v647 = vcvt.s32.f32 %v645
      %v648 = vcvt.s32.f32 %v646
      %649 = vadd.xlane.f32.xlu0 %v647
      %v650 = vpop.xlane.xlu0 %649
      %651 = vadd.xlane.f32.xlu0 %v648
      %v652 = vpop.xlane.xlu0 %651
      %v653 = vcvt.f32.s32 %v650
      %v654 = vcvt.f32.s32 %v652
      %v655 = vshll.u32 %v654, 16
      %v656 = vadd.s32 %v655, %v653
      %v657 = vadd.s32 %v527, %v528
      %v658 = vand.u32 %v657, 65535
      %v659 = vshrl.u32 %v657, 16
      %v660 = vcvt.s32.f32 %v658
      %v661 = vcvt.s32.f32 %v659
      %662 = vadd.xlane.f32.xlu0 %v660
      %v663 = vpop.xlane.xlu0 %662
      %664 = vadd.xlane.f32.xlu0 %v661
      %v665 = vpop.xlane.xlu0 %664
      %v666 = vcvt.f32.s32 %v663
      %v667 = vcvt.f32.s32 %v665
      %v668 = vshll.u32 %v667, 16
      %v669 = vadd.s32 %v668, %v666
      %v670 = vadd.s32 %v529, %v530
      %v671 = vand.u32 %v670, 65535
      %v672 = vshrl.u32 %v670, 16
      %v673 = vcvt.s32.f32 %v671
      %v674 = vcvt.s32.f32 %v672
      %675 = vadd.xlane.f32.xlu0 %v673
      %v676 = vpop.xlane.xlu0 %675
      %677 = vadd.xlane.f32.xlu0 %v674
      %v678 = vpop.xlane.xlu0 %677
      %v679 = vcvt.f32.s32 %v676
      %v680 = vcvt.f32.s32 %v678
      %v681 = vshll.u32 %v680, 16
      %v682 = vadd.s32 %v681, %v679
      %v683 = vadd.s32 %v531, %v532
      %v684 = vand.u32 %v683, 65535
      %v685 = vshrl.u32 %v683, 16
      %v686 = vcvt.s32.f32 %v684
      %v687 = vcvt.s32.f32 %v685
      %688 = vadd.xlane.f32.xlu0 %v686
      %v689 = vpop.xlane.xlu0 %688
      %690 = vadd.xlane.f32.xlu0 %v687
      %v691 = vpop.xlane.xlu0 %690
      %v692 = vcvt.f32.s32 %v689
      %v693 = vcvt.f32.s32 %v691
      %v694 = vshll.u32 %v693, 16
      %v695 = vadd.s32 %v694, %v692
      %v696 = vadd.s32 %v533, %v534
      %v697 = vand.u32 %v696, 65535
      %v698 = vshrl.u32 %v696, 16
      %v699 = vcvt.s32.f32 %v697
      %v700 = vcvt.s32.f32 %v698
      %701 = vadd.xlane.f32.xlu0 %v699
      %v702 = vpop.xlane.xlu0 %701
      %703 = vadd.xlane.f32.xlu0 %v700
      %v704 = vpop.xlane.xlu0 %703
      %v705 = vcvt.f32.s32 %v702
      %v706 = vcvt.f32.s32 %v704
      %v707 = vshll.u32 %v706, 16
      %v708 = vadd.s32 %v707, %v705
      %v709 = vadd.s32 %v535, %v536
      %v710 = vand.u32 %v709, 65535
      %v711 = vshrl.u32 %v709, 16
      %v712 = vcvt.s32.f32 %v710
      %v713 = vcvt.s32.f32 %v711
      %714 = vadd.xlane.f32.xlu0 %v712
      %v715 = vpop.xlane.xlu0 %714
      %716 = vadd.xlane.f32.xlu0 %v713
      %v717 = vpop.xlane.xlu0 %716
      %v718 = vcvt.f32.s32 %v715
      %v719 = vcvt.f32.s32 %v717
      %v720 = vshll.u32 %v719, 16
      %v721 = vadd.s32 %v720, %v718
      %v722 = vadd.s32 %v537, %v538
      %v723 = vand.u32 %v722, 65535
      %v724 = vshrl.u32 %v722, 16
      %v725 = vcvt.s32.f32 %v723
      %v726 = vcvt.s32.f32 %v724
      %727 = vadd.xlane.f32.xlu0 %v725
      %v728 = vpop.xlane.xlu0 %727
      %729 = vadd.xlane.f32.xlu0 %v726
      %v730 = vpop.xlane.xlu0 %729
      %v731 = vcvt.f32.s32 %v728
      %v732 = vcvt.f32.s32 %v730
      %v733 = vshll.u32 %v732, 16
      %v734 = vadd.s32 %v733, %v731
      %v735 = vadd.s32 %v539, %v540
      %v736 = vand.u32 %v735, 65535
      %v737 = vshrl.u32 %v735, 16
      %v738 = vcvt.s32.f32 %v736
      %v739 = vcvt.s32.f32 %v737
      %740 = vadd.xlane.f32.xlu0 %v738
      %v741 = vpop.xlane.xlu0 %740
      %742 = vadd.xlane.f32.xlu0 %v739
      %v743 = vpop.xlane.xlu0 %742
      %v744 = vcvt.f32.s32 %v741
      %v745 = vcvt.f32.s32 %v743
      %v746 = vshll.u32 %v745, 16
      %v747 = vadd.s32 %v746, %v744
      %v748 = vadd.s32 %v541, %v542
      %v749 = vand.u32 %v748, 65535
      %v750 = vshrl.u32 %v748, 16
      %v751 = vcvt.s32.f32 %v749
      %v752 = vcvt.s32.f32 %v750
      %753 = vadd.xlane.f32.xlu0 %v751
      %v754 = vpop.xlane.xlu0 %753
      %755 = vadd.xlane.f32.xlu0 %v752
      %v756 = vpop.xlane.xlu0 %755
      %v757 = vcvt.f32.s32 %v754
      %v758 = vcvt.f32.s32 %v756
      %v759 = vshll.u32 %v758, 16
      %v760 = vadd.s32 %v759, %v757
      %v761 = vadd.s32 %v543, %v544
      %v762 = vand.u32 %v761, 65535
      %v763 = vshrl.u32 %v761, 16
      %v764 = vcvt.s32.f32 %v762
      %v765 = vcvt.s32.f32 %v763
      %766 = vadd.xlane.f32.xlu0 %v764
      %v767 = vpop.xlane.xlu0 %766
      %768 = vadd.xlane.f32.xlu0 %v765
      %v769 = vpop.xlane.xlu0 %768
      %v770 = vcvt.f32.s32 %v767
      %v771 = vcvt.f32.s32 %v769
      %v772 = vshll.u32 %v771, 16
      %v773 = vadd.s32 %v772, %v770
      %v774 = vadd.s32 %v545, %v546
      %v775 = vand.u32 %v774, 65535
      %v776 = vshrl.u32 %v774, 16
      %v777 = vcvt.s32.f32 %v775
      %v778 = vcvt.s32.f32 %v776
      %779 = vadd.xlane.f32.xlu0 %v777
      %v780 = vpop.xlane.xlu0 %779
      %781 = vadd.xlane.f32.xlu0 %v778
      %v782 = vpop.xlane.xlu0 %781
      %v783 = vcvt.f32.s32 %v780
      %v784 = vcvt.f32.s32 %v782
      %v785 = vshll.u32 %v784, 16
      %v786 = vadd.s32 %v785, %v783
      %v787 = vadd.s32 %v547, %v548
      %v788 = vand.u32 %v787, 65535
      %v789 = vshrl.u32 %v787, 16
      %v790 = vcvt.s32.f32 %v788
      %v791 = vcvt.s32.f32 %v789
      %792 = vadd.xlane.f32.xlu0 %v790
      %v793 = vpop.xlane.xlu0 %792
      %794 = vadd.xlane.f32.xlu0 %v791
      %v795 = vpop.xlane.xlu0 %794
      %v796 = vcvt.f32.s32 %v793
      %v797 = vcvt.f32.s32 %v795
      %v798 = vshll.u32 %v797, 16
      %v799 = vadd.s32 %v798, %v796
      %v800 = vadd.s32 %v549, %v550
      %v801 = vand.u32 %v800, 65535
      %v802 = vshrl.u32 %v800, 16
      %v803 = vcvt.s32.f32 %v801
      %v804 = vcvt.s32.f32 %v802
      %805 = vadd.xlane.f32.xlu0 %v803
      %v806 = vpop.xlane.xlu0 %805
      %807 = vadd.xlane.f32.xlu0 %v804
      %v808 = vpop.xlane.xlu0 %807
      %v809 = vcvt.f32.s32 %v806
      %v810 = vcvt.f32.s32 %v808
      %v811 = vshll.u32 %v810, 16
      %v812 = vadd.s32 %v811, %v809
      %v813 = vadd.s32 %v551, %v552
      %v814 = vand.u32 %v813, 65535
      %v815 = vshrl.u32 %v813, 16
      %v816 = vcvt.s32.f32 %v814
      %v817 = vcvt.s32.f32 %v815
      %818 = vadd.xlane.f32.xlu0 %v816
      %v819 = vpop.xlane.xlu0 %818
      %820 = vadd.xlane.f32.xlu0 %v817
      %v821 = vpop.xlane.xlu0 %820
      %v822 = vcvt.f32.s32 %v819
      %v823 = vcvt.f32.s32 %v821
      %v824 = vshll.u32 %v823, 16
      %v825 = vadd.s32 %v824, %v822
      %v826 = vadd.s32 %v553, %v554
      %v827 = vand.u32 %v826, 65535
      %v828 = vshrl.u32 %v826, 16
      %v829 = vcvt.s32.f32 %v827
      %v830 = vcvt.s32.f32 %v828
      %831 = vadd.xlane.f32.xlu0 %v829
      %v832 = vpop.xlane.xlu0 %831
      %833 = vadd.xlane.f32.xlu0 %v830
      %v834 = vpop.xlane.xlu0 %833
      %v835 = vcvt.f32.s32 %v832
      %v836 = vcvt.f32.s32 %v834
      %v837 = vshll.u32 %v836, 16
      %v838 = vadd.s32 %v837, %v835
      %v839 = vadd.s32 %v555, %v556
      %v840 = vand.u32 %v839, 65535
      %v841 = vshrl.u32 %v839, 16
      %v842 = vcvt.s32.f32 %v840
      %v843 = vcvt.s32.f32 %v841
      %844 = vadd.xlane.f32.xlu0 %v842
      %v845 = vpop.xlane.xlu0 %844
      %846 = vadd.xlane.f32.xlu0 %v843
      %v847 = vpop.xlane.xlu0 %846
      %v848 = vcvt.f32.s32 %v845
      %v849 = vcvt.f32.s32 %v847
      %v850 = vshll.u32 %v849, 16
      %v851 = vadd.s32 %v850, %v848
      %v852 = vadd.s32 %v557, %v558
      %v853 = vand.u32 %v852, 65535
      %v854 = vshrl.u32 %v852, 16
      %v855 = vcvt.s32.f32 %v853
      %v856 = vcvt.s32.f32 %v854
      %857 = vadd.xlane.f32.xlu0 %v855
      %v858 = vpop.xlane.xlu0 %857
      %859 = vadd.xlane.f32.xlu0 %v856
      %v860 = vpop.xlane.xlu0 %859
      %v861 = vcvt.f32.s32 %v858
      %v862 = vcvt.f32.s32 %v860
      %v863 = vshll.u32 %v862, 16
      %v864 = vadd.s32 %v863, %v861
      %v865 = vadd.s32 %v559, %v560
      %v866 = vand.u32 %v865, 65535
      %v867 = vshrl.u32 %v865, 16
      %v868 = vcvt.s32.f32 %v866
      %v869 = vcvt.s32.f32 %v867
      %870 = vadd.xlane.f32.xlu0 %v868
      %v871 = vpop.xlane.xlu0 %870
      %872 = vadd.xlane.f32.xlu0 %v869
      %v873 = vpop.xlane.xlu0 %872
      %v874 = vcvt.f32.s32 %v871
      %v875 = vcvt.f32.s32 %v873
      %v876 = vshll.u32 %v875, 16
      %v877 = vadd.s32 %v876, %v874
      %v878 = vadd.s32 %v561, %v562
      %v879 = vand.u32 %v878, 65535
      %v880 = vshrl.u32 %v878, 16
      %v881 = vcvt.s32.f32 %v879
      %v882 = vcvt.s32.f32 %v880
      %883 = vadd.xlane.f32.xlu0 %v881
      %v884 = vpop.xlane.xlu0 %883
      %885 = vadd.xlane.f32.xlu0 %v882
      %v886 = vpop.xlane.xlu0 %885
      %v887 = vcvt.f32.s32 %v884
      %v888 = vcvt.f32.s32 %v886
      %v889 = vshll.u32 %v888, 16
      %v890 = vadd.s32 %v889, %v887
      %v891 = vadd.s32 %v563, %v564
      %v892 = vand.u32 %v891, 65535
      %v893 = vshrl.u32 %v891, 16
      %v894 = vcvt.s32.f32 %v892
      %v895 = vcvt.s32.f32 %v893
      %896 = vadd.xlane.f32.xlu0 %v894
      %v897 = vpop.xlane.xlu0 %896
      %898 = vadd.xlane.f32.xlu0 %v895
      %v899 = vpop.xlane.xlu0 %898
      %v900 = vcvt.f32.s32 %v897
      %v901 = vcvt.f32.s32 %v899
      %v902 = vshll.u32 %v901, 16
      %v903 = vadd.s32 %v902, %v900
      %v904 = vadd.s32 %v565, %v566
      %v905 = vand.u32 %v904, 65535
      %v906 = vshrl.u32 %v904, 16
      %v907 = vcvt.s32.f32 %v905
      %v908 = vcvt.s32.f32 %v906
      %909 = vadd.xlane.f32.xlu0 %v907
      %v910 = vpop.xlane.xlu0 %909
      %911 = vadd.xlane.f32.xlu0 %v908
      %v912 = vpop.xlane.xlu0 %911
      %v913 = vcvt.f32.s32 %v910
      %v914 = vcvt.f32.s32 %v912
      %v915 = vshll.u32 %v914, 16
      %v916 = vadd.s32 %v915, %v913
      %v917 = vadd.s32 %v567, %v568
      %v918 = vand.u32 %v917, 65535
      %v919 = vshrl.u32 %v917, 16
      %v920 = vcvt.s32.f32 %v918
      %v921 = vcvt.s32.f32 %v919
      %922 = vadd.xlane.f32.xlu0 %v920
      %v923 = vpop.xlane.xlu0 %922
      %924 = vadd.xlane.f32.xlu0 %v921
      %v925 = vpop.xlane.xlu0 %924
      %v926 = vcvt.f32.s32 %v923
      %v927 = vcvt.f32.s32 %v925
      %v928 = vshll.u32 %v927, 16
      %v929 = vadd.s32 %v928, %v926
      %v930 = vadd.s32 %v569, %v570
      %v931 = vand.u32 %v930, 65535
      %v932 = vshrl.u32 %v930, 16
      %v933 = vcvt.s32.f32 %v931
      %v934 = vcvt.s32.f32 %v932
      %935 = vadd.xlane.f32.xlu0 %v933
      %v936 = vpop.xlane.xlu0 %935
      %937 = vadd.xlane.f32.xlu0 %v934
      %v938 = vpop.xlane.xlu0 %937
      %v939 = vcvt.f32.s32 %v936
      %v940 = vcvt.f32.s32 %v938
      %v941 = vshll.u32 %v940, 16
      %v942 = vadd.s32 %v941, %v939
      %v943 = vadd.s32 %v571, %v572
      %v944 = vand.u32 %v943, 65535
      %v945 = vshrl.u32 %v943, 16
      %v946 = vcvt.s32.f32 %v944
      %v947 = vcvt.s32.f32 %v945
      %948 = vadd.xlane.f32.xlu0 %v946
      %v949 = vpop.xlane.xlu0 %948
      %950 = vadd.xlane.f32.xlu0 %v947
      %v951 = vpop.xlane.xlu0 %950
      %v952 = vcvt.f32.s32 %v949
      %v953 = vcvt.f32.s32 %v951
      %v954 = vshll.u32 %v953, 16
      %v955 = vadd.s32 %v954, %v952
      %v956 = vadd.s32 %v573, %v574
      %v957 = vand.u32 %v956, 65535
      %v958 = vshrl.u32 %v956, 16
      %v959 = vcvt.s32.f32 %v957
      %v960 = vcvt.s32.f32 %v958
      %961 = vadd.xlane.f32.xlu0 %v959
      %v962 = vpop.xlane.xlu0 %961
      %963 = vadd.xlane.f32.xlu0 %v960
      %v964 = vpop.xlane.xlu0 %963
      %v965 = vcvt.f32.s32 %v962
      %v966 = vcvt.f32.s32 %v964
      %v967 = vshll.u32 %v966, 16
      %v968 = vadd.s32 %v967, %v965
      %v969 = vadd.s32 %v575, %v576
      %v970 = vand.u32 %v969, 65535
      %v971 = vshrl.u32 %v969, 16
      %v972 = vcvt.s32.f32 %v970
      %v973 = vcvt.s32.f32 %v971
      %974 = vadd.xlane.f32.xlu0 %v972
      %v975 = vpop.xlane.xlu0 %974
      %976 = vadd.xlane.f32.xlu0 %v973
      %v977 = vpop.xlane.xlu0 %976
      %v978 = vcvt.f32.s32 %v975
      %v979 = vcvt.f32.s32 %v977
      %v980 = vshll.u32 %v979, 16
      %v981 = vadd.s32 %v980, %v978
      %v982 = vadd.s32 %v577, %v578
      %v983 = vand.u32 %v982, 65535
      %v984 = vshrl.u32 %v982, 16
      %v985 = vcvt.s32.f32 %v983
      %v986 = vcvt.s32.f32 %v984
      %987 = vadd.xlane.f32.xlu0 %v985
      %v988 = vpop.xlane.xlu0 %987
      %989 = vadd.xlane.f32.xlu0 %v986
      %v990 = vpop.xlane.xlu0 %989
      %v991 = vcvt.f32.s32 %v988
      %v992 = vcvt.f32.s32 %v990
      %v993 = vshll.u32 %v992, 16
      %v994 = vadd.s32 %v993, %v991
      %v995 = vlaneseq
      %v996 = vshrl.u32 %v995, 7
      %v997 = vsub.s32 0, %v996
      %v998 = vrot.slane %v281, %v997
      %vm999 = vcmp.eq.s32.totalorder %v591, %v998
      %vm1000 = vcmp.eq.s32.totalorder %v604, %v998
      %vm1001 = vcmp.eq.s32.totalorder %v617, %v998
      %vm1002 = vcmp.eq.s32.totalorder %v630, %v998
      %vm1003 = vcmp.eq.s32.totalorder %v643, %v998
      %vm1004 = vcmp.eq.s32.totalorder %v656, %v998
      %vm1005 = vcmp.eq.s32.totalorder %v669, %v998
      %vm1006 = vcmp.eq.s32.totalorder %v682, %v998
      %vm1007 = vcmp.eq.s32.totalorder %v695, %v998
      %vm1008 = vcmp.eq.s32.totalorder %v708, %v998
      %vm1009 = vcmp.eq.s32.totalorder %v721, %v998
      %vm1010 = vcmp.eq.s32.totalorder %v734, %v998
      %vm1011 = vcmp.eq.s32.totalorder %v747, %v998
      %vm1012 = vcmp.eq.s32.totalorder %v760, %v998
      %vm1013 = vcmp.eq.s32.totalorder %v773, %v998
      %vm1014 = vcmp.eq.s32.totalorder %v786, %v998
      %vm1015 = vcmp.eq.s32.totalorder %v799, %v998
      %vm1016 = vcmp.eq.s32.totalorder %v812, %v998
      %vm1017 = vcmp.eq.s32.totalorder %v825, %v998
      %vm1018 = vcmp.eq.s32.totalorder %v838, %v998
      %vm1019 = vcmp.eq.s32.totalorder %v851, %v998
      %vm1020 = vcmp.eq.s32.totalorder %v864, %v998
      %vm1021 = vcmp.eq.s32.totalorder %v877, %v998
      %vm1022 = vcmp.eq.s32.totalorder %v890, %v998
      %vm1023 = vcmp.eq.s32.totalorder %v903, %v998
      %vm1024 = vcmp.eq.s32.totalorder %v916, %v998
      %vm1025 = vcmp.eq.s32.totalorder %v929, %v998
      %vm1026 = vcmp.eq.s32.totalorder %v942, %v998
      %vm1027 = vcmp.eq.s32.totalorder %v955, %v998
      %vm1028 = vcmp.eq.s32.totalorder %v968, %v998
      %vm1029 = vcmp.eq.s32.totalorder %v981, %v998
      %vm1030 = vcmp.eq.s32.totalorder %v994, %v998
      %v1031 = vsel %vm999, 1, 0
      %v1032 = vsel %vm1000, 1, 0
      %v1033 = vsel %vm1001, 1, 0
      %v1034 = vsel %vm1002, 1, 0
      %v1035 = vsel %vm1003, 1, 0
      %v1036 = vsel %vm1004, 1, 0
      %v1037 = vsel %vm1005, 1, 0
      %v1038 = vsel %vm1006, 1, 0
      %v1039 = vsel %vm1007, 1, 0
      %v1040 = vsel %vm1008, 1, 0
      %v1041 = vsel %vm1009, 1, 0
      %v1042 = vsel %vm1010, 1, 0
      %v1043 = vsel %vm1011, 1, 0
      %v1044 = vsel %vm1012, 1, 0
      %v1045 = vsel %vm1013, 1, 0
      %v1046 = vsel %vm1014, 1, 0
      %v1047 = vsel %vm1015, 1, 0
      %v1048 = vsel %vm1016, 1, 0
      %v1049 = vsel %vm1017, 1, 0
      %v1050 = vsel %vm1018, 1, 0
      %v1051 = vsel %vm1019, 1, 0
      %v1052 = vsel %vm1020, 1, 0
      %v1053 = vsel %vm1021, 1, 0
      %v1054 = vsel %vm1022, 1, 0
      %v1055 = vsel %vm1023, 1, 0
      %v1056 = vsel %vm1024, 1, 0
      %v1057 = vsel %vm1025, 1, 0
      %v1058 = vsel %vm1026, 1, 0
      %v1059 = vsel %vm1027, 1, 0
      %v1060 = vsel %vm1028, 1, 0
      %v1061 = vsel %vm1029, 1, 0
      %v1062 = vsel %vm1030, 1, 0
      %v1063 = vcvt.s32.f32 %v1031
      %v1064 = vcvt.s32.f32 %v1032
      %v1065 = vcvt.s32.f32 %v1033
      %v1066 = vcvt.s32.f32 %v1034
      %v1067 = vcvt.s32.f32 %v1035
      %v1068 = vcvt.s32.f32 %v1036
      %v1069 = vcvt.s32.f32 %v1037
      %v1070 = vcvt.s32.f32 %v1038
      %v1071 = vcvt.s32.f32 %v1039
      %v1072 = vcvt.s32.f32 %v1040
      %v1073 = vcvt.s32.f32 %v1041
      %v1074 = vcvt.s32.f32 %v1042
      %v1075 = vcvt.s32.f32 %v1043
      %v1076 = vcvt.s32.f32 %v1044
      %v1077 = vcvt.s32.f32 %v1045
      %v1078 = vcvt.s32.f32 %v1046
      %v1079 = vcvt.s32.f32 %v1047
      %v1080 = vcvt.s32.f32 %v1048
      %v1081 = vcvt.s32.f32 %v1049
      %v1082 = vcvt.s32.f32 %v1050
      %v1083 = vcvt.s32.f32 %v1051
      %v1084 = vcvt.s32.f32 %v1052
      %v1085 = vcvt.s32.f32 %v1053
      %v1086 = vcvt.s32.f32 %v1054
      %v1087 = vcvt.s32.f32 %v1055
      %v1088 = vcvt.s32.f32 %v1056
      %v1089 = vcvt.s32.f32 %v1057
      %v1090 = vcvt.s32.f32 %v1058
      %v1091 = vcvt.s32.f32 %v1059
      %v1092 = vcvt.s32.f32 %v1060
      %v1093 = vcvt.s32.f32 %v1061
      %v1094 = vcvt.s32.f32 %v1062
      %v1095 = vld [vmem:[%s188] sm:$0x77]
      %v1097 = vcombine.high %v1095, %v1095
      %1099 = vmatprep.subr.mxu0 0.0
      %1100 = vmatpush1.msra.mxu0 %v1078
      %1101 = vmatprep.subr.mxu0 0.0
      %1102 = vmatpush1.msra.mxu0 %v1077
      %1103 = vmatprep.subr.mxu0 0.0
      %1104 = vmatpush1.msra.mxu0 %v1076
      %1105 = vmatprep.subr.mxu0 0.0
      %1106 = vmatpush1.msra.mxu0 %v1075
      %1107 = vmatprep.subr.mxu0 0.0
      %1108 = vmatpush1.msra.mxu0 %v1074
      %1109 = vmatprep.subr.mxu0 0.0
      %1110 = vmatpush1.msra.mxu0 %v1073
      %1111 = vmatprep.subr.mxu0 0.0
      %1112 = vmatpush1.msra.mxu0 %v1072
      %1113 = vmatprep.subr.mxu0 0.0
      %1114 = vmatpush1.msra.mxu0 %v1071
      %1115 = vmatprep.subr.mxu0 0.0
      %1116 = vmatpush1.msra.mxu0 %v1070
      %1117 = vmatprep.subr.mxu0 0.0
      %1118 = vmatpush1.msra.mxu0 %v1069
      %1119 = vmatprep.subr.mxu0 0.0
      %1120 = vmatpush1.msra.mxu0 %v1068
      %1121 = vmatprep.subr.mxu0 0.0
      %1122 = vmatpush1.msra.mxu0 %v1067
      %1123 = vmatprep.subr.mxu0 0.0
      %1124 = vmatpush1.msra.mxu0 %v1066
      %1125 = vmatprep.subr.mxu0 0.0
      %1126 = vmatpush1.msra.mxu0 %v1065
      %1127 = vmatprep.subr.mxu0 0.0
      %1128 = vmatpush1.msra.mxu0 %v1064
      %1129 = vmatprep.subr.mxu0 0.0
      %1130 = vmatpush1.msra.mxu0 %v1063
      %1131 = vmatprep.subr.mxu0 0.0
      %1132 = vmatpush2.msra.mxu0 %v1094
      %1133 = vmatprep.subr.mxu0 0.0
      %1134 = vmatpush2.msra.mxu0 %v1093
      %1135 = vmatprep.subr.mxu0 0.0
      %1136 = vmatpush2.msra.mxu0 %v1092
      %1137 = vmatprep.subr.mxu0 0.0
      %1138 = vmatpush2.msra.mxu0 %v1091
      %1139 = vmatprep.subr.mxu0 0.0
      %1140 = vmatpush2.msra.mxu0 %v1090
      %1141 = vmatprep.subr.mxu0 0.0
      %1142 = vmatpush2.msra.mxu0 %v1089
      %1143 = vmatprep.subr.mxu0 0.0
      %1144 = vmatpush2.msra.mxu0 %v1088
      %1145 = vmatprep.subr.mxu0 0.0
      %1146 = vmatpush2.msra.mxu0 %v1087
      %1147 = vmatprep.subr.mxu0 0.0
      %1148 = vmatpush2.msra.mxu0 %v1086
      %1149 = vmatprep.subr.mxu0 0.0
      %1150 = vmatpush2.msra.mxu0 %v1085
      %1151 = vmatprep.subr.mxu0 0.0
      %1152 = vmatpush2.msra.mxu0 %v1084
      %1153 = vmatprep.subr.mxu0 0.0
      %1154 = vmatpush2.msra.mxu0 %v1083
      %1155 = vmatprep.subr.mxu0 0.0
      %1156 = vmatpush2.msra.mxu0 %v1082
      %1157 = vmatprep.subr.mxu0 0.0
      %1158 = vmatpush2.msra.mxu0 %v1081
      %1159 = vmatprep.subr.mxu0 0.0
      %1160 = vmatpush2.msra.mxu0 %v1080
      %1161 = vmatprep.subr.mxu0 0.0
      %1162 = vmatpush2.msra.mxu0 %v1079
      %1163 = vmatprep.mubr.f32.mxu0 %v1097
      %1164 = vmatmul.mubr.f32.gmra.mxu0 %v1095
      %v1165 = vpop.f32.mrf.mxu0
      %v1166 = vadd.f32 0.0, %v1165
      %v1167 = vpop.f32.mrf.mxu0
      %1168 = vdwg.mxu0
      %vm1169 = vcmask 124928
      %1170 = vst.msk [vmem:[%s199] sm:$0x7] %vm1169, %v1166
      %p1171 = scmp.lt.s32.totalorder %s14, 1
      %s1172 = scalar_select %p1171, %s14, 1
      %s1173 = smul.addr %s1172, 4
      %s1174 = scalar_lea.vmem %s3, %s1173
      // Predicated region
      $region33: #{_random_point_sampling_impl.1} parent=31 // pred_check
        %p1175 = pneg %p110
      $region34: #{_random_point_sampling_impl.1} parent=31 // pred_check_branch
        %1177 = sbr.rel (%p1175) target = $region36
      $region35: #{_random_point_sampling_impl.1} parent=31 // pred_region
        _
      $region36: #{_random_point_sampling_impl.1} parent=31 // pred_fallthru
        _
    $region32: #{_random_point_sampling_impl.1} parent=5 // pred_fallthru
      _
    %p1178 = scmp.le.s32.totalorder 2, %s9
    // Predicated region
    $region37: #{_random_point_sampling_impl.1} parent=5 // pred_check
      %p1179 = pneg %p1178
    $region38: #{_random_point_sampling_impl.1} parent=5 // pred_check_branch
      %1181 = sbr.rel (%p1179) target = $region40
    $region39: #{_random_point_sampling_impl.1} parent=5 // pred_region
      %s1182 = ssub.s32 %s9, 2
      // Predicated region
      $region41: #{_random_point_sampling_impl.1} parent=39 // pred_check
        %p1183 = pneg %p116
      $region42: #{_random_point_sampling_impl.1} parent=39 // pred_check_branch
        %1185 = sbr.rel (%p1183) target = $region44
      $region43: #{_random_point_sampling_impl.1} parent=39 // pred_region
        %p1186 = scmp.lt.s32.totalorder %s15, 1
        %s1187 = scalar_select %p1186, %s15, 1
        %s1188 = smul.addr %s1187, 4
        %s1189 = scalar_lea.vmem %s3, %s1188
      $region44: #{_random_point_sampling_impl.1} parent=39 // pred_fallthru
        _
    $region40: #{_random_point_sampling_impl.1} parent=5 // pred_fallthru
      _
  $region6: #{_random_point_sampling_impl.1} parent=0 // loop_footer
    %s13 = sadd.s32 1, %s9
  $region7: #{_random_point_sampling_impl.1} parent=0 // loop_footer_branch
    %8 = sbr.rel target = $region3
  $region8: #{_random_point_sampling_impl.1} parent=0 // loop_exit
    _

</llo_original>
